<compile_context>
chip_gen: v5e
topology: v5e:2x2
jax: 0.10.0
libtpu: 0.0.40
codegen_flags: <defaults>
</compile_context>

<pallas_src>
import jax
import jax.numpy as jnp
from jax.experimental import pallas as pl
from jax.experimental.pallas import tpu as pltpu


def _round_up(x, m):
    return (x + m - 1) // m * m


# --------------------------------------------------------------------------
# Kernel A (stats): per-tile partial sum(x) over voxels and Gram = X @ X^T.
# Zero-padded columns contribute 0, so no masking is needed.
# --------------------------------------------------------------------------
def _stats_kernel(x_ref, gram_ref, sum_ref):
    x = x_ref[...]                                          # (C, tile_s) f32
    gram_ref[...] = jax.lax.dot_general(                    # X @ X^T : (C, C)
        x, x, (((1,), (1,)), ((), ())),
        preferred_element_type=jnp.float32)
    sum_ref[...] = jnp.sum(x, axis=1, keepdims=True)        # (C, 1)


# --------------------------------------------------------------------------
# Kernel B (fused): h = relu(W1' x + b1') ; z = W2 h + b2 ; L2-normalize per
# voxel (column).  Everything stays in registers; output store is lane-dense.
# --------------------------------------------------------------------------
def _fused_kernel(x_ref, w1_ref, b1_ref, w2_ref, b2_ref, out_ref):
    x = x_ref[...]                                               # (C, tile_s)
    h = jnp.dot(w1_ref[...], x, preferred_element_type=jnp.float32)
    h = jnp.maximum(h + b1_ref[...], 0.0)                        # BN+ReLU folded
    z = jnp.dot(w2_ref[...], h, preferred_element_type=jnp.float32)
    z = z + b2_ref[...]                                          # (P, tile_s)
    # F.normalize(p=2, dim=channel): z / max(||z||, 1e-12) per voxel.
    ss = jnp.sum(z * z, axis=0, keepdims=True)                   # (1, tile_s)
    out_ref[...] = z * jax.lax.rsqrt(jnp.maximum(ss, 1e-24))


# --------------------------------------------------------------------------
# Wrapper
# --------------------------------------------------------------------------
def projection_head_forward(x_ncdhw, params, *, max_tile_s=2048, bn_eps=1e-5):
    """x_ncdhw: (N, C, D, H, W) float32.  Returns (N, P, D, H, W) float32."""
    w1, b1, gamma, beta, w2, b2 = (params[k] for k in
                                   ("w1", "b1", "gamma", "beta", "w2", "b2"))
    N, C, D, H, W = x_ncdhw.shape
    P = w2.shape[0]
    S = D * H * W
    M_total = float(N * S)                       # true voxel count (no padding)

    tile_s = min(max_tile_s, _round_up(S, 128))  # lane-dense spatial tile
    S_pad = _round_up(S, tile_s)
    n_tiles = S_pad // tile_s

    x3d = x_ncdhw.reshape(N, C, S)               # free reshape, no transpose
    if S_pad != S:
        x3d = jnp.pad(x3d, ((0, 0), (0, 0), (0, S_pad - S)))

    cparams = pltpu.CompilerParams(
        dimension_semantics=("parallel", "parallel"),
        vmem_limit_bytes=32 * 1024 * 1024)

    # ---- Kernel A: per-tile partial statistics ----
    gram_parts, sum_parts = pl.pallas_call(
        _stats_kernel,
        out_shape=(
            jax.ShapeDtypeStruct((N, n_tiles, C, C), jnp.float32),
            jax.ShapeDtypeStruct((N, n_tiles, C, 1), jnp.float32),
        ),
        grid_spec=pltpu.PrefetchScalarGridSpec(
            num_scalar_prefetch=0,
            grid=(N, n_tiles),
            in_specs=[pl.BlockSpec((None, C, tile_s), lambda n, i: (n, 0, i))],
            out_specs=[
                pl.BlockSpec((None, None, C, C), lambda n, i: (n, i, 0, 0)),
                pl.BlockSpec((None, None, C, 1), lambda n, i: (n, i, 0, 0)),
            ],
        ),
        compiler_params=cparams,
    )(x3d)

    # ---- Exact BatchNorm (training) batch stats of y1 = W1 x + b1, derived
    #      analytically from sum(x) and Gram(x) (tiny C x C math in XLA).
    gram = jnp.sum(gram_parts, axis=(0, 1))                  # (C, C)
    sum_x = jnp.sum(sum_parts, axis=(0, 1))                  # (C, 1)
    sum_y1 = w1 @ sum_x + M_total * b1                       # (C, 1)
    mean = sum_y1 / M_total
    sumsq_y1 = (jnp.sum((w1 @ gram) * w1, axis=1, keepdims=True)
                + 2.0 * b1 * (w1 @ sum_x) + M_total * b1 * b1)
    var = jnp.maximum(sumsq_y1 / M_total - mean * mean, 0.0)  # biased (train BN)
    inv_std = jax.lax.rsqrt(var + bn_eps)

    # Fold BN + affine into conv1:  relu(a*(W1 x + b1 - mean) + beta)
    a = gamma * inv_std                                      # (C, 1)
    w1_eff = a * w1                                          # (C, C)
    b1_eff = a * (b1 - mean) + beta                          # (C, 1)

    # ---- Kernel B: fused conv1' -> ReLU -> conv2 -> L2 normalize ----
    out_pad = pl.pallas_call(
        _fused_kernel,
        out_shape=jax.ShapeDtypeStruct((N, P, S_pad), jnp.float32),
        grid_spec=pltpu.PrefetchScalarGridSpec(
            num_scalar_prefetch=0,
            grid=(N, n_tiles),
            in_specs=[
                pl.BlockSpec((None, C, tile_s), lambda n, i: (n, 0, i)),
                pl.BlockSpec((C, C), lambda n, i: (0, 0)),
                pl.BlockSpec((C, 1), lambda n, i: (0, 0)),
                pl.BlockSpec((P, C), lambda n, i: (0, 0)),
                pl.BlockSpec((P, 1), lambda n, i: (0, 0)),
            ],
            out_specs=pl.BlockSpec((None, P, tile_s), lambda n, i: (n, 0, i)),
        ),
        compiler_params=cparams,
    )(x3d, w1_eff, b1_eff, w2, b2)

    out = out_pad[:, :, :S] if S_pad != S else out_pad
    return out.reshape(N, P, D, H, W)


# --------------------------------------------------------------------------
# Pure-JAX reference (for correctness check)
# --------------------------------------------------------------------------
def projection_head_ref(x_ncdhw, params, *, bn_eps=1e-5):
    w1, b1, gamma, beta, w2, b2 = (params[k] for k in
                                   ("w1", "b1", "gamma", "beta", "w2", "b2"))
    N, C, D, H, W = x_ncdhw.shape
    P = w2.shape[0]
    xc = x_ncdhw.reshape(N, C, -1)                           # (N, C, S)
    y1 = jnp.einsum('oc,ncs->nos', w1, xc) + b1
    mean = jnp.mean(y1, axis=(0, 2), keepdims=True)
    var = jnp.mean((y1 - mean) ** 2, axis=(0, 2), keepdims=True)
    h = jnp.maximum((y1 - mean) * jax.lax.rsqrt(var + bn_eps) * gamma + beta, 0.0)
    z = jnp.einsum('pc,ncs->nps', w2, h) + b2
    nrm = jnp.sqrt(jnp.sum(z * z, axis=1, keepdims=True))
    z = z / jnp.maximum(nrm, 1e-12)
    return z.reshape(N, P, D, H, W)


# --------------------------------------------------------------------------
def make_params(key, dim_in, proj_dim):
    """Deterministic synthetic weights.

    Conv3d(k=1) weights of shape (out, in, 1, 1, 1) are stored as (out, in)
    matrices and biases/BN params as (out, 1) columns so that 1x1x1 conv over
    channels-on-sublane data is simply W @ x_cols.
    """
    k1, k2, k3, k4 = jax.random.split(key, 4)
    return dict(
        w1=jax.random.normal(k1, (dim_in, dim_in), jnp.float32) * 0.2,
        b1=jax.random.normal(k2, (dim_in, 1), jnp.float32) * 0.05,
        gamma=jnp.ones((dim_in, 1), jnp.float32),   # BatchNorm3d affine init
        beta=jnp.zeros((dim_in, 1), jnp.float32),
        w2=jax.random.normal(k3, (proj_dim, dim_in), jnp.float32) * 0.2,
        b2=jax.random.normal(k4, (proj_dim, 1), jnp.float32) * 0.05,
    )


if __name__ == "__main__":
    key = jax.random.PRNGKey(0)
    kx, kp = jax.random.split(key)

    N, C, D, H, W = 2, 4, 8, 8, 8            # small NCDHW input
    proj_dim = 32

    x = jax.random.normal(kx, (N, C, D, H, W), jnp.float32)
    params = make_params(kp, C, proj_dim)

    out = jax.block_until_ready(projection_head_forward(x, params))
    ref = projection_head_ref(x, params)

    assert out.shape == (N, proj_dim, D, H, W)
    assert jnp.max(jnp.abs(out - ref)) < 2e-4, "mismatch vs pure-JAX reference"

    print("KERNEL_OK")
</pallas_src>

<mosaic_0001>
module attributes {stable_mosaic.version = 11 : i64} {
  func.func @_stats_kernel(%arg0: i32, %arg1: i32, %arg2: memref<1x4x512xf32, #tpu.memory_space<vmem>>, %arg3: memref<1x1x4x4xf32, #tpu.memory_space<vmem>>, %arg4: memref<1x1x4x1xf32, #tpu.memory_space<vmem>>) attributes {dimension_semantics = [#tpu.dimension_semantics<parallel>, #tpu.dimension_semantics<parallel>], iteration_bounds = array<i64: 2, 1>, scalar_prefetch = 0 : i64, scratch_operands = 0 : i64, tpu.core_type = #tpu.core_type<tc>, window_params = [{transform_indices = @transform_0, window_bounds = array<i64: 1, 4, 512>}, {transform_indices = @transform_1, window_bounds = array<i64: 1, 1, 4, 4>}, {transform_indices = @transform_2, window_bounds = array<i64: 1, 1, 4, 1>}]} {
    %c0 = arith.constant 0 : index
    %c0_0 = arith.constant 0 : index
    %c0_1 = arith.constant 0 : index
    %0 = vector.load %arg2[%c0, %c0_0, %c0_1] : memref<1x4x512xf32, #tpu.memory_space<vmem>>, vector<1x4x512xf32>
    %1 = vector.shape_cast %0 : vector<1x4x512xf32> to vector<4x512xf32>
    %cst = arith.constant dense<0.000000e+00> : vector<4x4xf32>
    %2 = tpu.matmul %1, %1, %cst {dimension_numbers = #tpu.dot_dimension_numbers<[1], [1], [0], [0], [0, 0, 1, 0], [], []>} : vector<4x512xf32>, vector<4x512xf32>, vector<4x4xf32> -> vector<4x4xf32>
    %c0_2 = arith.constant 0 : index
    %c0_3 = arith.constant 0 : index
    %c0_4 = arith.constant 0 : index
    %c0_5 = arith.constant 0 : index
    %3 = vector.load %arg3[%c0_2, %c0_3, %c0_4, %c0_5] : memref<1x1x4x4xf32, #tpu.memory_space<vmem>>, vector<1x1x4x4xf32>
    %4 = vector.shape_cast %3 : vector<1x1x4x4xf32> to vector<4x4xf32>
    %5 = vector.shape_cast %2 : vector<4x4xf32> to vector<1x1x4x4xf32>
    tpu.vector_store %arg3[%c0_2, %c0_3, %c0_4, %c0_5], %5 {strides = array<i32>} : memref<1x1x4x4xf32, #tpu.memory_space<vmem>>, vector<1x1x4x4xf32>,
    %cst_6 = arith.constant dense<0.000000e+00> : vector<4xf32>
    %6 = vector.multi_reduction <add>, %1, %cst_6 [1] : vector<4x512xf32> to vector<4xf32>
    %7 = vector.shape_cast %6 : vector<4xf32> to vector<4x1xf32>
    %c0_7 = arith.constant 0 : index
    %c0_8 = arith.constant 0 : index
    %c0_9 = arith.constant 0 : index
    %c0_10 = arith.constant 0 : index
    %8 = vector.load %arg4[%c0_7, %c0_8, %c0_9, %c0_10] : memref<1x1x4x1xf32, #tpu.memory_space<vmem>>, vector<1x1x4x1xf32>
    %9 = vector.shape_cast %8 : vector<1x1x4x1xf32> to vector<4x1xf32>
    %10 = vector.shape_cast %7 : vector<4x1xf32> to vector<1x1x4x1xf32>
    tpu.vector_store %arg4[%c0_7, %c0_8, %c0_9, %c0_10], %10 {strides = array<i32>} : memref<1x1x4x1xf32, #tpu.memory_space<vmem>>, vector<1x1x4x1xf32>,
    return
  }
  func.func @transform_0(%arg0: i32, %arg1: i32) -> (i32, i32, i32) {
    %c0_i32 = arith.constant 0 : i32
    %c0_i32_0 = arith.constant 0 : i32
    return %arg0, %c0_i32, %arg1 : i32, i32, i32
  }
  func.func @transform_1(%arg0: i32, %arg1: i32) -> (i32, i32, i32, i32) {
    %c0_i32 = arith.constant 0 : i32
    %c0_i32_0 = arith.constant 0 : i32
    %c0_i32_1 = arith.constant 0 : i32
    return %arg0, %arg1, %c0_i32, %c0_i32_0 : i32, i32, i32, i32
  }
  func.func @transform_2(%arg0: i32, %arg1: i32) -> (i32, i32, i32, i32) {
    %c0_i32 = arith.constant 0 : i32
    %c0_i32_0 = arith.constant 0 : i32
    %c0_i32_1 = arith.constant 0 : i32
    return %arg0, %arg1, %c0_i32, %c0_i32_0 : i32, i32, i32, i32
  }
}

</mosaic_0001>

<llo_original>
// kernel: tpu_custom_call.1
$region0: #{tpu_custom_call.1}
  #allocation0 [shape = 'u32[]', space=smem, size = 0x4, offset = 0x4, fixed_abs, tag = 'smem constant byte address 0x4 - core index']
  #allocation1 [shape = 'u32[72,128]{1,0:T(1,128)}', space=vmem, size = 0x9000, scoped, tag = 'internal scratch']
  %s0 = inlined_call_operand.hbm [shape: f32[2,4,512], index: 0, kind: input, shape index: {}]
  %s1 = inlined_call_operand.hbm [shape: f32[2,1,4,4], index: 1, kind: output, shape index: {0}]
  %s2 = inlined_call_operand.vmem [shape: f32[2,1,4,1], index: 2, kind: output, shape index: {1}]
  %3 = xla_tuple %s1, %s2
  %s4 = sld [smem:[#allocation0]]
  $region49: #{tpu_custom_call.1} parent=0
    _
  %s6 = ssub.s32 1, %s4
  %s7 = scalar_select 0, %s6, %s4
  $region1: #{tpu_custom_call.1} parent=0
    #allocation2 [shape = 'u8[16384]{0}', space=vmem, size = 0x4000, scoped, tag = 'input window, operand 0']
    #allocation3 [shape = 's32[2]{0}', space=sflag, size = 0x8, scoped, tag = 'scoped memory for tpu_custom_call.1']
    #allocation4 [shape = 's32[2]{0}', space=sflag, size = 0x8, scoped, tag = 'scoped memory for tpu_custom_call.1']
    #allocation5 [shape = 'u8[4096]{0}', space=vmem, size = 0x1000, scoped, tag = 'output window, operand 0']
    %8 = vsyncpa [#allocation3], 0
    %s9 = scalar_lea.sflag [#allocation3], 1
    %10 = vsyncpa %s9, 0
    %11 = vsyncpa [#allocation4], 0
    %s12 = scalar_lea.sflag [#allocation4], 1
    %13 = vsyncpa %s12, 0
    loop: start=0, step=1, limit=4
    $region2: #{tpu_custom_call.1} parent=1 // loop_pre_header
      _
    $region3: #{tpu_custom_call.1} parent=1 // loop_header
      %s15 = sphi 0, %s19
      %p16 = scmp.ge.s32.totalorder %s15, 4
      %s22 = sphi 0, %s34
      %s23 = sphi 0, %s30
      %s24 = sphi 0, %s22
      %s25 = sphi 0, %s23
      %s26 = sphi 0, %s24
      %s27 = sphi 0, %s25
      %s39 = sphi 0, %s41
      %s42 = sphi 0, %s39
      %s43 = sphi 0, %s42
      %s59 = sphi 0, %s43
      %s67 = sphi 0, %s69
      %s70 = sphi 0, %s67
      %s71 = sphi 0, %s70
      %s87 = sphi 0, %s71
      %s95 = sphi 0, %s97
      %s98 = sphi 0, %s95
      %s99 = sphi 0, %s98
      %s115 = sphi 0, %s99
    $region4: #{tpu_custom_call.1} parent=1 // loop_header_branch
      %18 = sbr.rel (%p16) target = $region8
    $region5: #{tpu_custom_call.1} parent=1 // loop_body
      %s20 = ssub.s32 %s15, 1
      %s21 = ssub.s32 %s15, 2
      %s28 = sadd.s32 1, %s23
      %p29 = scmp.ge.s32.totalorder %s28, 1
      %s30 = scalar_select %p29, 0, %s28
      %s31 = sadd.s32 1, %s22
      %s32 = scalar_select %p29, %s31, %s22
      %p33 = scmp.ge.s32.totalorder %s32, 2
      %s34 = scalar_select %p33, 0, %s32
      %s35 = ssub.s32 %s22, %s34
      %s36 = ssub.s32 %s23, %s30
      %s37 = sor.u32 %s35, %s36
      %p38 = scmp.eq.s32.totalorder %s37, 0
      %s40 = sadd.s32 %s39, 1
      %s41 = scalar_select %p38, %s39, %s40
      %p44 = pneg %p38
      %p45 = scmp.eq.s32.totalorder %s15, 1
      %p46 = por %p44, %p45
      %p47 = scmp.ne.s32.totalorder %s39, %s42
      %p48 = scmp.eq.s32.totalorder %s15, 0
      %p49 = por %p47, %p48
      %p50 = scmp.ne.s32.totalorder %s39, %s42
      %p51 = scmp.eq.s32.totalorder %s20, 1
      %p52 = por %p50, %p51
      %p53 = scmp.ne.s32.totalorder %s42, %s43
      %p54 = scmp.eq.s32.totalorder %s20, 0
      %p55 = por %p53, %p54
      %p56 = scmp.ne.s32.totalorder %s42, %s43
      %p57 = scmp.eq.s32.totalorder %s21, 1
      %p58 = por %p56, %p57
      %p60 = scmp.ne.s32.totalorder %s43, %s59
      %p61 = scmp.eq.s32.totalorder %s21, 0
      %p62 = por %p60, %p61
      %s63 = ssub.s32 %s22, %s34
      %s64 = ssub.s32 %s23, %s30
      %s65 = sor.u32 %s63, %s64
      %p66 = scmp.eq.s32.totalorder %s65, 0
      %s68 = sadd.s32 %s67, 1
      %s69 = scalar_select %p66, %s67, %s68
      %p72 = pneg %p66
      %p73 = scmp.eq.s32.totalorder %s15, 1
      %p74 = por %p72, %p73
      %p75 = scmp.ne.s32.totalorder %s67, %s70
      %p76 = scmp.eq.s32.totalorder %s15, 0
      %p77 = por %p75, %p76
      %p78 = scmp.ne.s32.totalorder %s67, %s70
      %p79 = scmp.eq.s32.totalorder %s20, 1
      %p80 = por %p78, %p79
      %p81 = scmp.ne.s32.totalorder %s70, %s71
      %p82 = scmp.eq.s32.totalorder %s20, 0
      %p83 = por %p81, %p82
      %p84 = scmp.ne.s32.totalorder %s70, %s71
      %p85 = scmp.eq.s32.totalorder %s21, 1
      %p86 = por %p84, %p85
      %p88 = scmp.ne.s32.totalorder %s71, %s87
      %p89 = scmp.eq.s32.totalorder %s21, 0
      %p90 = por %p88, %p89
      %s91 = ssub.s32 %s22, %s34
      %s92 = ssub.s32 %s23, %s30
      %s93 = sor.u32 %s91, %s92
      %p94 = scmp.eq.s32.totalorder %s93, 0
      %s96 = sadd.s32 %s95, 1
      %s97 = scalar_select %p94, %s95, %s96
      %p100 = pneg %p94
      %p101 = scmp.eq.s32.totalorder %s15, 1
      %p102 = por %p100, %p101
      %p103 = scmp.ne.s32.totalorder %s95, %s98
      %p104 = scmp.eq.s32.totalorder %s15, 0
      %p105 = por %p103, %p104
      %p106 = scmp.ne.s32.totalorder %s95, %s98
      %p107 = scmp.eq.s32.totalorder %s20, 1
      %p108 = por %p106, %p107
      %p109 = scmp.ne.s32.totalorder %s98, %s99
      %p110 = scmp.eq.s32.totalorder %s20, 0
      %p111 = por %p109, %p110
      %p112 = scmp.ne.s32.totalorder %s98, %s99
      %p113 = scmp.eq.s32.totalorder %s21, 1
      %p114 = por %p112, %p113
      %p116 = scmp.ne.s32.totalorder %s99, %s115
      %p117 = scmp.eq.s32.totalorder %s21, 0
      %p118 = por %p116, %p117
      %p119 = scmp.le.s32.totalorder 1, %s15
      %p120 = scmp.lt.s32.totalorder %s15, 3
      %p121 = pnand %p119, %p120
      %p122 = pneg %p121
      // Predicated region
      $region9: #{tpu_custom_call.1} parent=5 // pred_check
        _
      $region10: #{tpu_custom_call.1} parent=5 // pred_check_branch
        %124 = sbr.rel (%p121) target = $region12
      $region11: #{tpu_custom_call.1} parent=5 // pred_region
        %s125 = ssub.s32 %s15, 1
      $region12: #{tpu_custom_call.1} parent=5 // pred_fallthru
        _
      %p126 = scmp.lt.s32.totalorder %s15, 2
      // Predicated region
      $region13: #{tpu_custom_call.1} parent=5 // pred_check
        %p127 = pneg %p126
      $region14: #{tpu_custom_call.1} parent=5 // pred_check_branch
        %129 = sbr.rel (%p127) target = $region16
      $region15: #{tpu_custom_call.1} parent=5 // pred_region
        // Predicated region
        $region17: #{tpu_custom_call.1} parent=15 // pred_check
          %p130 = pneg %p49
        $region18: #{tpu_custom_call.1} parent=15 // pred_check_branch
          %132 = sbr.rel (%p130) target = $region20
        $region19: #{tpu_custom_call.1} parent=15 // pred_region
          %s133 = sand.u32 %s39, 1
          %s134 = scalar_lea.sflag [#allocation3], %s133
          %s135 = sand.u32 %s39, 1
          %s136 = smul.addr %s135, 16
          %s137 = scalar_lea.vmem [#allocation2], %s136
          %s138 = smul.u32 4, %s23
          %140 = vsyncadd %s134, 0
          %s141 = smul.addr %s22, 4
          %s142 = sadd.s32 %s138, %s141
          %s143 = smul.addr %s142, 4
          %s144 = scalar_lea.hbm %s0, %s143
          %s146 = sshll.u32 %s144, 4
          %s147 = int_to_ptr.hbm [resolvable:$true] %s146
          %s148 = sshll.u32 %s137, 4
          %s149 = int_to_ptr.vmem [resolvable:$true] %s148
          %151 = dma.hbm_to_vmem [thread:$0]  %s147, 256, %s149, %s134
        $region20: #{tpu_custom_call.1} parent=15 // pred_fallthru
          _
      $region16: #{tpu_custom_call.1} parent=5 // pred_fallthru
        _
      %p152 = scmp.le.s32.totalorder 1, %s15
      %p153 = scmp.lt.s32.totalorder %s15, 3
      %p154 = pnand %p152, %p153
      %p155 = pneg %p154
      // Predicated region
      $region21: #{tpu_custom_call.1} parent=5 // pred_check
        _
      $region22: #{tpu_custom_call.1} parent=5 // pred_check_branch
        %157 = sbr.rel (%p154) target = $region24
      $region23: #{tpu_custom_call.1} parent=5 // pred_region
        %s158 = ssub.s32 %s15, 1
        %s159 = sand.u32 %s42, 1
        %s160 = scalar_lea.sflag [#allocation3], %s159
        %s161 = sand.u32 %s42, 1
        %s162 = smul.addr %s161, 16
        %s163 = scalar_lea.vmem [#allocation2], %s162
        // Predicated region
        $region25: #{tpu_custom_call.1} parent=23 // pred_check
          %p164 = pneg %p55
        $region26: #{tpu_custom_call.1} parent=23 // pred_check_branch
          %166 = sbr.rel (%p164) target = $region28
        $region27: #{tpu_custom_call.1} parent=23 // pred_region
          %168 = dma.done %s160, 256
        $region28: #{tpu_custom_call.1} parent=23 // pred_fallthru
          _
        %s169 = sand.u32 %s42, 1
        %s170 = scalar_lea.sflag [#allocation3], %s169
        %s171 = sand.u32 %s42, 1
        %s172 = smul.addr %s171, 16
        %s173 = scalar_lea.vmem [#allocation2], %s172
        %p174 = pneg %p55
        %p175 = pneg %p52
        %p176 = pneg %p83
        %p177 = pneg %p80
        %s178 = sand.u32 %s70, 1
        %s179 = scalar_lea.sflag [#allocation4], %s178
        %s180 = sand.u32 %s70, 1
        %s181 = smul.addr %s180, 4
        %s182 = scalar_lea.vmem [#allocation5], %s181
        %p183 = pneg %p111
        %p184 = pneg %p108
        %p185 = scmp.lt.s32.totalorder %s24, 1
        %s186 = scalar_select %p185, %s24, 1
        %p187 = scmp.lt.s32.totalorder %s25, 0
        %s188 = scalar_select %p187, %s25, 0
        %s189 = sadd.s32 %s188, %s186
        %s190 = smul.addr %s189, 4
        %s191 = scalar_lea.vmem %s2, %s190
        %s192 = smul.u32 4, %s25
        %p193 = scmp.lt.s32.totalorder %s24, 1
        %s194 = scalar_select %p193, %s24, 1
        %p195 = scmp.lt.s32.totalorder %s25, 0
        %s196 = scalar_select %p195, %s25, 0
        %s197 = sadd.s32 %s196, %s194
        %s198 = smul.addr %s197, 4
        %s199 = scalar_lea.vmem %s2, %s198
        %v200 = vld [vmem:[%s163] sm:$0xff]
        %v201 = vld [vmem:[%s163 + $0x8] sm:$0xff]
        %204 = vst [vmem:[#allocation1] ss:$2 sm:$0xff] %v200
        %s205 = scalar_lea.vmem [#allocation1], 16
        %206 = vst [vmem:[%s205] ss:$2 sm:$0xff] %v201
        %v207 = vld.sshfl [vmem:[#allocation1] sm:$0xff pattern:$0x75316420]
        %v208 = vld.sshfl [vmem:[#allocation1 + $0x8] sm:$0xff pattern:$0x75316420]
        %v209 = vld.sshfl [vmem:[#allocation1 + $0x10] sm:$0xff pattern:$0x75316420]
        %v210 = vld.sshfl [vmem:[#allocation1 + $0x18] sm:$0xff pattern:$0x75316420]
        %215 = vst [vmem:[#allocation1] ss:$2 sm:$0xff] %v200
        %s216 = scalar_lea.vmem [#allocation1], 16
        %217 = vst [vmem:[%s216] ss:$2 sm:$0xff] %v201
        %v218 = vld.sshfl [vmem:[#allocation1] sm:$0xff pattern:$0x75316420]
        %v219 = vld.sshfl [vmem:[#allocation1 + $0x8] sm:$0xff pattern:$0x75316420]
        %v220 = vld.sshfl [vmem:[#allocation1 + $0x10] sm:$0xff pattern:$0x75316420]
        %v221 = vld.sshfl [vmem:[#allocation1 + $0x18] sm:$0xff pattern:$0x75316420]
        %226 = vmatpush.xpose.msra.mxu0 0.0
        %227 = vmatpush.xpose.msra.mxu0 0.0
        %228 = vmatpush.xpose.msra.mxu0 0.0
        %229 = vmatpush.xpose.msra.mxu0 0.0
        %230 = vmatpush.xpose.msra.mxu0 0.0
        %231 = vmatpush.xpose.msra.mxu0 0.0
        %232 = vmatpush.xpose.msra.mxu0 0.0
        %233 = vmatpush.xpose.msra.mxu0 0.0
        %234 = vmatpush.xpose.msra.mxu0 0.0
        %235 = vmatpush.xpose.msra.mxu0 0.0
        %236 = vmatpush.xpose.msra.mxu0 0.0
        %237 = vmatpush.xpose.msra.mxu0 0.0
        %238 = vmatpush.xpose.msra.mxu0 0.0
        %239 = vmatpush.xpose.msra.mxu0 0.0
        %240 = vmatpush.xpose.msra.mxu0 0.0
        %241 = vmatpush.xpose.msra.mxu0 %v218
        %242 = vmatmul.f32.gmra.mxu0 %v207
        %v243 = vpop.f32.mrf.mxu0
        %v244 = vadd.f32 0.0, %v243
        %245 = vdwg.mxu0
        %246 = vmatpush.xpose.msra.mxu0 0.0
        %247 = vmatpush.xpose.msra.mxu0 0.0
        %248 = vmatpush.xpose.msra.mxu0 0.0
        %249 = vmatpush.xpose.msra.mxu0 0.0
        %250 = vmatpush.xpose.msra.mxu0 0.0
        %251 = vmatpush.xpose.msra.mxu0 0.0
        %252 = vmatpush.xpose.msra.mxu0 0.0
        %253 = vmatpush.xpose.msra.mxu0 0.0
        %254 = vmatpush.xpose.msra.mxu0 0.0
        %255 = vmatpush.xpose.msra.mxu0 0.0
        %256 = vmatpush.xpose.msra.mxu0 0.0
        %257 = vmatpush.xpose.msra.mxu0 0.0
        %258 = vmatpush.xpose.msra.mxu0 0.0
        %259 = vmatpush.xpose.msra.mxu0 0.0
        %260 = vmatpush.xpose.msra.mxu0 0.0
        %261 = vmatpush.xpose.msra.mxu0 %v219
        %262 = vmatmul.f32.gmra.mxu0 %v208
        %v263 = vpop.f32.mrf.mxu0
        %v264 = vadd.f32 %v244, %v263
        %265 = vdwg.mxu0
        %266 = vmatpush.xpose.msra.mxu0 0.0
        %267 = vmatpush.xpose.msra.mxu0 0.0
        %268 = vmatpush.xpose.msra.mxu0 0.0
        %269 = vmatpush.xpose.msra.mxu0 0.0
        %270 = vmatpush.xpose.msra.mxu0 0.0
        %271 = vmatpush.xpose.msra.mxu0 0.0
        %272 = vmatpush.xpose.msra.mxu0 0.0
        %273 = vmatpush.xpose.msra.mxu0 0.0
        %274 = vmatpush.xpose.msra.mxu0 0.0
        %275 = vmatpush.xpose.msra.mxu0 0.0
        %276 = vmatpush.xpose.msra.mxu0 0.0
        %277 = vmatpush.xpose.msra.mxu0 0.0
        %278 = vmatpush.xpose.msra.mxu0 0.0
        %279 = vmatpush.xpose.msra.mxu0 0.0
        %280 = vmatpush.xpose.msra.mxu0 0.0
        %281 = vmatpush.xpose.msra.mxu0 %v220
        %282 = vmatmul.f32.gmra.mxu0 %v209
        %v283 = vpop.f32.mrf.mxu0
        %v284 = vadd.f32 %v264, %v283
        %285 = vdwg.mxu0
        %286 = vmatpush.xpose.msra.mxu0 0.0
        %287 = vmatpush.xpose.msra.mxu0 0.0
        %288 = vmatpush.xpose.msra.mxu0 0.0
        %289 = vmatpush.xpose.msra.mxu0 0.0
        %290 = vmatpush.xpose.msra.mxu0 0.0
        %291 = vmatpush.xpose.msra.mxu0 0.0
        %292 = vmatpush.xpose.msra.mxu0 0.0
        %293 = vmatpush.xpose.msra.mxu0 0.0
        %294 = vmatpush.xpose.msra.mxu0 0.0
        %295 = vmatpush.xpose.msra.mxu0 0.0
        %296 = vmatpush.xpose.msra.mxu0 0.0
        %297 = vmatpush.xpose.msra.mxu0 0.0
        %298 = vmatpush.xpose.msra.mxu0 0.0
        %299 = vmatpush.xpose.msra.mxu0 0.0
        %300 = vmatpush.xpose.msra.mxu0 0.0
        %301 = vmatpush.xpose.msra.mxu0 %v221
        %302 = vmatmul.f32.gmra.mxu0 %v210
        %v303 = vpop.f32.mrf.mxu0
        %v304 = vadd.f32 %v284, %v303
        %305 = vdwg.mxu0
        %vm306 = vcmask 27648
        %307 = vst.msk [vmem:[%s182] sm:$0xf] %vm306, %v304
        %308 = vst [vmem:[#allocation1] ss:$2 sm:$0xff] %v200
        %s309 = scalar_lea.vmem [#allocation1], 16
        %310 = vst [vmem:[%s309] ss:$2 sm:$0xff] %v201
        %v311 = vld.sshfl [vmem:[#allocation1] sm:$0xff pattern:$0x75316420]
        %v312 = vld.sshfl [vmem:[#allocation1 + $0x8] sm:$0xff pattern:$0x75316420]
        %v313 = vld.sshfl [vmem:[#allocation1 + $0x10] sm:$0xff pattern:$0x75316420]
        %v314 = vld.sshfl [vmem:[#allocation1 + $0x18] sm:$0xff pattern:$0x75316420]
        %vm319 = vcmask 1043456
        %v320 = vsel %vm319, %v311, 0.0
        %v321 = vsel %vm319, %v312, 0.0
        %v322 = vadd.f32 %v320, %v321
        %v323 = vsel %vm319, %v313, 0.0
        %v324 = vadd.f32 %v322, %v323
        %v325 = vsel %vm319, %v314, 0.0
        %v326 = vadd.f32 %v324, %v325
        %327 = vadd.xlane.f32.xlu0 %v326
        %v328 = vpop.xlane.xlu0 %327
        %vm329 = vcmask 3072
        %330 = vst.msk [vmem:[%s199] sm:$0xf] %vm329, %v328
        %s331 = sand.u32 %s70, 1
        %s332 = scalar_lea.sflag [#allocation4], %s331
        %s333 = sand.u32 %s70, 1
        %s334 = smul.addr %s333, 4
        %s335 = scalar_lea.vmem [#allocation5], %s334
        %p336 = scmp.lt.s32.totalorder %s24, 1
        %s337 = scalar_select %p336, %s24, 1
        %p338 = scmp.lt.s32.totalorder %s25, 0
        %s339 = scalar_select %p338, %s25, 0
        %s340 = sadd.s32 %s339, %s337
        %s341 = smul.addr %s340, 4
        %s342 = scalar_lea.vmem %s2, %s341
        // Predicated region
        $region29: #{tpu_custom_call.1} parent=23 // pred_check
          %p343 = pneg %p80
        $region30: #{tpu_custom_call.1} parent=23 // pred_check_branch
          %345 = sbr.rel (%p343) target = $region32
        $region31: #{tpu_custom_call.1} parent=23 // pred_region
          %347 = vsyncadd %s332, 0
          %s348 = sadd.s32 %s25, %s24
          %s349 = smul.addr %s348, 4
          %s350 = scalar_lea.hbm %s1, %s349
          %s352 = sshll.u32 %s335, 4
          %s353 = int_to_ptr.vmem [resolvable:$true] %s352
          %s354 = sshll.u32 %s350, 4
          %s355 = int_to_ptr.hbm [resolvable:$true] %s354
          %357 = dma.vmem_to_hbm [thread:$0]  %s353, 64, %s355, %s332
        $region32: #{tpu_custom_call.1} parent=23 // pred_fallthru
          _
        // Predicated region
        $region33: #{tpu_custom_call.1} parent=23 // pred_check
          %p358 = pneg %p108
        $region34: #{tpu_custom_call.1} parent=23 // pred_check_branch
          %360 = sbr.rel (%p358) target = $region36
        $region35: #{tpu_custom_call.1} parent=23 // pred_region
          _
        $region36: #{tpu_custom_call.1} parent=23 // pred_fallthru
          _
      $region24: #{tpu_custom_call.1} parent=5 // pred_fallthru
        _
      %p361 = scmp.le.s32.totalorder 2, %s15
      // Predicated region
      $region37: #{tpu_custom_call.1} parent=5 // pred_check
        %p362 = pneg %p361
      $region38: #{tpu_custom_call.1} parent=5 // pred_check_branch
        %364 = sbr.rel (%p362) target = $region40
      $region39: #{tpu_custom_call.1} parent=5 // pred_region
        %s365 = ssub.s32 %s15, 2
        // Predicated region
        $region41: #{tpu_custom_call.1} parent=39 // pred_check
          %p366 = pneg %p86
        $region42: #{tpu_custom_call.1} parent=39 // pred_check_branch
          %368 = sbr.rel (%p366) target = $region44
        $region43: #{tpu_custom_call.1} parent=39 // pred_region
          %s369 = sand.u32 %s71, 1
          %s370 = scalar_lea.sflag [#allocation4], %s369
          %s371 = sand.u32 %s71, 1
          %s372 = smul.addr %s371, 4
          %s373 = scalar_lea.vmem [#allocation5], %s372
          %375 = dma.done %s370, 64
        $region44: #{tpu_custom_call.1} parent=39 // pred_fallthru
          _
        // Predicated region
        $region45: #{tpu_custom_call.1} parent=39 // pred_check
          %p376 = pneg %p114
        $region46: #{tpu_custom_call.1} parent=39 // pred_check_branch
          %378 = sbr.rel (%p376) target = $region48
        $region47: #{tpu_custom_call.1} parent=39 // pred_region
          %p379 = scmp.lt.s32.totalorder %s26, 1
          %s380 = scalar_select %p379, %s26, 1
          %p381 = scmp.lt.s32.totalorder %s27, 0
          %s382 = scalar_select %p381, %s27, 0
          %s383 = sadd.s32 %s382, %s380
          %s384 = smul.addr %s383, 4
          %s385 = scalar_lea.vmem %s2, %s384
        $region48: #{tpu_custom_call.1} parent=39 // pred_fallthru
          _
      $region40: #{tpu_custom_call.1} parent=5 // pred_fallthru
        _
    $region6: #{tpu_custom_call.1} parent=1 // loop_footer
      %s19 = sadd.s32 1, %s15
    $region7: #{tpu_custom_call.1} parent=1 // loop_footer_branch
      %14 = sbr.rel target = $region3
    $region8: #{tpu_custom_call.1} parent=1 // loop_exit
      _
    %386 = vsyncpa [#allocation3], 1
    %s387 = scalar_lea.sflag [#allocation3], 1
    %388 = vsyncpa %s387, 1
    %389 = vsyncpa [#allocation4], 1
    %s390 = scalar_lea.sflag [#allocation4], 1
    %391 = vsyncpa %s390, 1

</llo_original>
